<compile_context>
chip_gen: v6e
topology: v6e:2x2x1
jax: 0.10.0
libtpu: 0.0.40
codegen_flags: <defaults>
</compile_context>

<pallas_src>
import jax
import jax.numpy as jnp
from jax.experimental import pallas as pl
from jax.experimental.pallas import tpu as pltpu


def _round_up(x: int, m: int) -> int:
    return ((x + m - 1) // m) * m


def _pick_tile(dim: int, desired: int, align: int):
    """Largest multiple of `align` dividing round_up(dim, align), capped at `desired`.

    Keeps padding limited to hardware alignment only (no pad copies for
    already-aligned dims).
    """
    padded = _round_up(max(dim, 1), align)
    best = align
    t = align
    cap = min(desired, padded)
    while t <= cap:
        if padded % t == 0:
            best = t
        t += align
    return best, padded


def _vmem_budget() -> int:
    """~70% of this chip's physical VMEM (64 MiB fallback, safe for v7x)."""
    cap = 64 * 1024 * 1024
    try:
        cap = int(getattr(pltpu.get_tpu_info(), "vmem_capacity_bytes", cap))
    except Exception:
        pass
    return int(cap * 0.7)


def normalize_dictionary(D: jax.Array) -> jax.Array:
    """Mimics the in-place `D_.data /= norm` mutation of the torch module."""
    return D / jnp.linalg.norm(D, axis=1, keepdims=True)


# --------------------------------------------------------------------------
# Fused kernel: S_ = exp(log_S); X_ += (S_ * inv_norm) @ D
# grid = (i over rows, k over atoms);  X block (tm, pM) is resident across k.
# --------------------------------------------------------------------------
def _fused_exp_matmul_kernel(log_s_ref, inv_ref, d_ref, s_ref, x_ref):
    # exp runs on the EUP slot; computed exactly once per (i, k) block.
    s = jnp.exp(log_s_ref[...].astype(jnp.float32))          # (tm, tk)
    s_ref[...] = s.astype(s_ref.dtype)                        # emit S_ block
    # Fold dictionary row-normalization into the LHS: S @ diag(inv) @ D.
    a = (s * inv_ref[...]).astype(d_ref.dtype)                # VPU, hidden

    @pl.when(pl.program_id(1) == 0)
    def _init():
        x_ref[...] = jnp.zeros_like(x_ref)

    # Accumulate straight into the resident f32 output block (no scratch).
    x_ref[...] += jnp.dot(a, d_ref[...], preferred_element_type=jnp.float32)


# --------------------------------------------------------------------------
# Fallback path kernels (only used when a full-width output block can't stay
# resident in VMEM): exp pass, then tiled matmul that consumes S_ directly.
# --------------------------------------------------------------------------
def _exp_kernel(log_s_ref, s_ref):
    s_ref[...] = jnp.exp(log_s_ref[...].astype(jnp.float32)).astype(s_ref.dtype)


def _matmul_kernel(s_ref, inv_ref, d_ref, x_ref):
    a = (s_ref[...].astype(jnp.float32) * inv_ref[...]).astype(d_ref.dtype)

    @pl.when(pl.program_id(2) == 0)
    def _init():
        x_ref[...] = jnp.zeros_like(x_ref)

    x_ref[...] += jnp.dot(a, d_ref[...], preferred_element_type=jnp.float32)


# --------------------------------------------------------------------------
# SparseCoding.forward
# --------------------------------------------------------------------------
def sparse_coding_forward(log_S: jax.Array, D: jax.Array, learn_D: bool, *,
                          use_bf16: bool = True,
                          tm_desired: int = 512, tk_desired: int = 1024,
                          tn_desired: int = 1024,
                          force_fallback: bool = False):
    """Returns (S_, X_) like SparseCoding.forward()."""
    N, K = log_S.shape
    K2, M = D.shape
    assert K == K2, "inner dims must match"

    budget = _vmem_budget()
    tm, pN = _pick_tile(N, tm_desired, 8)
    tk, pK = _pick_tile(K, tk_desired, 128)
    pM = _round_up(M, 128)

    d_dtype = jnp.bfloat16 if use_bf16 else jnp.float32
    d_bytes = 2 if use_bf16 else 4

    # 1/||D_row||_2 as a tiny (1, pK) side input (plain JAX; K scalars).
    # Padded K entries are 0 so exp(0)=1 columns of padded log_S contribute 0.
    # (No eps, matching torch: an all-zero dictionary row -> inf, same hazard.)
    if learn_D:
        inv = jax.lax.rsqrt(jnp.sum(D.astype(jnp.float32) ** 2, axis=1))
    else:
        inv = jnp.ones((K,), jnp.float32)
    inv_norm = inv.reshape(1, K)

    a_in = log_S
    d_in = D.astype(d_dtype)
    if (pN, pK) != (N, K):
        a_in = jnp.pad(a_in, ((0, pN - N), (0, pK - K)))
    if (pK, pM) != (K, M):
        d_in = jnp.pad(d_in, ((0, pK - K), (0, pM - M)))
        inv_norm = jnp.pad(inv_norm, ((0, 0), (0, pK - K)))

    def fused_bytes(tm_, tk_):
        return (2 * tm_ * tk_ * 4          # log_S in (double buffered)
                + 2 * tk_ * 4              # inv_norm in
                + 2 * tk_ * pM * d_bytes   # D in (full output width)
                + 2 * tm_ * tk_ * 4        # S_ out
                + 2 * tm_ * pM * 4)        # X_ out (resident f32 accumulator)

    f_tm, f_tk = tm, tk
    while fused_bytes(f_tm, f_tk) > budget and f_tk >= 256:
        f_tk //= 2
    while fused_bytes(f_tm, f_tk) > budget and f_tm >= 16:
        f_tm //= 2
    fused_ok = (fused_bytes(f_tm, f_tk) <= budget) and not force_fallback

    if fused_ok:
        # Note: on v7x the only "parallel" axis here is i; with a single i
        # block (tiny N) one TensorCore idles -- batch more samples if that
        # matters.
        s_pad, x_pad = pl.pallas_call(
            _fused_exp_matmul_kernel,
            out_shape=(jax.ShapeDtypeStruct((pN, pK), log_S.dtype),
                       jax.ShapeDtypeStruct((pN, pM), jnp.float32)),
            grid_spec=pltpu.PrefetchScalarGridSpec(
                num_scalar_prefetch=0,
                grid=(pN // f_tm, pK // f_tk),
                in_specs=[pl.BlockSpec((f_tm, f_tk), lambda i, k: (i, k)),
                          pl.BlockSpec((1, f_tk), lambda i, k: (0, k)),
                          pl.BlockSpec((f_tk, pM), lambda i, k: (k, 0))],
                out_specs=[pl.BlockSpec((f_tm, f_tk), lambda i, k: (i, k)),
                           pl.BlockSpec((f_tm, pM), lambda i, k: (i, 0))]),
            compiler_params=pltpu.CompilerParams(
                dimension_semantics=("parallel", "arbitrary"),
                vmem_limit_bytes=budget),
        )(a_in, inv_norm, d_in)
    else:
        # --- exp pass (big lane-dense tiles, HBM-roofline bound) ---
        te_m, _ = _pick_tile(N, 512, 8)
        te_k, _ = _pick_tile(K, 2048, 128)
        s_pad = pl.pallas_call(
            _exp_kernel,
            out_shape=jax.ShapeDtypeStruct((pN, pK), log_S.dtype),
            grid=(pN // te_m, pK // te_k),
            in_specs=[pl.BlockSpec((te_m, te_k), lambda i, k: (i, k))],
            out_specs=pl.BlockSpec((te_m, te_k), lambda i, k: (i, k)),
            compiler_params=pltpu.CompilerParams(
                dimension_semantics=("parallel", "parallel"),
                vmem_limit_bytes=budget),
        )(a_in)

        # --- tiled matmul consuming S_ (no exp recompute per j tile) ---
        tn, _ = _pick_tile(M, tn_desired, 128)
        m_tm, m_tk = tm, tk

        def mm_bytes(tm_, tk_, tn_):
            return (2 * tm_ * tk_ * 4 + 2 * tk_ * 4
                    + 2 * tk_ * tn_ * d_bytes + 2 * tm_ * tn_ * 4)

        while mm_bytes(m_tm, m_tk, tn) > budget and m_tk >= 256:
            m_tk //= 2
        x_pad = pl.pallas_call(
            _matmul_kernel,
            out_shape=jax.ShapeDtypeStruct((pN, pM), jnp.float32),
            grid_spec=pltpu.PrefetchScalarGridSpec(
                num_scalar_prefetch=0,
                grid=(pN // m_tm, pM // tn, pK // m_tk),
                in_specs=[pl.BlockSpec((m_tm, m_tk), lambda i, j, k: (i, k)),
                          pl.BlockSpec((1, m_tk), lambda i, j, k: (0, k)),
                          pl.BlockSpec((m_tk, tn), lambda i, j, k: (k, j))],
                out_specs=pl.BlockSpec((m_tm, tn), lambda i, j, k: (i, j))),
            compiler_params=pltpu.CompilerParams(
                dimension_semantics=("parallel", "parallel", "arbitrary"),
                vmem_limit_bytes=budget),
        )(s_pad, inv_norm, d_in)

    S_ = s_pad if (pN, pK) == (N, K) else s_pad[:N, :K]
    X_ = x_pad if (pN, pM) == (N, M) else x_pad[:N, :M]
    return S_, X_


if __name__ == "__main__":
    key = jax.random.PRNGKey(0)
    k1, k2 = jax.random.split(key)

    # log_S_: (num_samples, num_atoms), D_: (num_atoms, data_dim)
    num_samples, num_atoms, data_dim = 16, 256, 256
    # The module initializes log_S_ = -10*ones; use random values (what log_S_
    # looks like after infer()) so the check is non-trivial.
    log_S = jax.random.normal(k1, (num_samples, num_atoms), jnp.float32) * 0.5 - 1.0
    D = jax.random.normal(k2, (num_atoms, data_dim), jnp.float32)

    # Pure-JAX reference of the torch forward.
    D_n = normalize_dictionary(D)
    S_ref = jnp.exp(log_S)
    X_ref_learn = S_ref @ D_n
    X_ref_fixed = S_ref @ D

    # 1) Fused kernel, bf16 MXU operands (default fast path).
    S1, X1 = jax.block_until_ready(
        sparse_coding_forward(log_S, D, learn_D=True))
    assert S1.shape == S_ref.shape and X1.shape == X_ref_learn.shape
    assert jnp.allclose(S1, S_ref, rtol=1e-5, atol=1e-6), "S_ mismatch (fused)"
    assert jnp.allclose(X1, X_ref_learn, rtol=2e-2, atol=2e-2), "X_ mismatch (fused bf16)"

    # 2) Fallback path (exp kernel + tiled matmul), forced for coverage.
    S2, X2 = jax.block_until_ready(
        sparse_coding_forward(log_S, D, learn_D=True, force_fallback=True))
    assert jnp.allclose(S2, S_ref, rtol=1e-5, atol=1e-6), "S_ mismatch (fallback)"
    assert jnp.allclose(X2, X_ref_learn, rtol=2e-2, atol=2e-2), "X_ mismatch (fallback bf16)"

    # 3) learn_D=False with f32 MXU operands (tight check, no normalization).
    S3, X3 = jax.block_until_ready(
        sparse_coding_forward(log_S, D, learn_D=False, use_bf16=False))
    assert jnp.allclose(S3, S_ref, rtol=1e-5, atol=1e-6), "S_ mismatch (f32)"
    assert jnp.allclose(X3, X_ref_fixed, rtol=1e-4, atol=1e-4), "X_ mismatch (f32)"

    print("KERNEL_OK")
</pallas_src>

<mosaic_0001>
module attributes {stable_mosaic.version = 11 : i64} {
  func.func @_fused_exp_matmul_kernel(%arg0: i32, %arg1: i32, %arg2: memref<16x256xf32, #tpu.memory_space<vmem>>, %arg3: memref<1x256xf32, #tpu.memory_space<vmem>>, %arg4: memref<256x256xbf16, #tpu.memory_space<vmem>>, %arg5: memref<16x256xf32, #tpu.memory_space<vmem>>, %arg6: memref<16x256xf32, #tpu.memory_space<vmem>>) attributes {dimension_semantics = [#tpu.dimension_semantics<parallel>, #tpu.dimension_semantics<arbitrary>], iteration_bounds = array<i64: 1, 1>, scalar_prefetch = 0 : i64, scratch_operands = 0 : i64, tpu.core_type = #tpu.core_type<tc>, window_params = [{transform_indices = @transform_0, window_bounds = array<i64: 16, 256>}, {transform_indices = @transform_1, window_bounds = array<i64: 1, 256>}, {transform_indices = @transform_2, window_bounds = array<i64: 256, 256>}, {transform_indices = @transform_3, window_bounds = array<i64: 16, 256>}, {transform_indices = @transform_4, window_bounds = array<i64: 16, 256>}]} {
    %c0 = arith.constant 0 : index
    %c0_0 = arith.constant 0 : index
    %0 = vector.load %arg2[%c0, %c0_0] : memref<16x256xf32, #tpu.memory_space<vmem>>, vector<16x256xf32>
    %1 = math.exp %0 : vector<16x256xf32>
    %c0_1 = arith.constant 0 : index
    %c0_2 = arith.constant 0 : index
    %2 = vector.load %arg5[%c0_1, %c0_2] : memref<16x256xf32, #tpu.memory_space<vmem>>, vector<16x256xf32>
    tpu.vector_store %arg5[%c0_1, %c0_2], %1 {strides = array<i32>} : memref<16x256xf32, #tpu.memory_space<vmem>>, vector<16x256xf32>,
    %c0_3 = arith.constant 0 : index
    %c0_4 = arith.constant 0 : index
    %3 = vector.load %arg3[%c0_3, %c0_4] : memref<1x256xf32, #tpu.memory_space<vmem>>, vector<1x256xf32>
    %4 = vector.broadcast %3 : vector<1x256xf32> to vector<16x256xf32>
    %5 = arith.mulf %1, %4 : vector<16x256xf32>
    %6 = arith.truncf %5 : vector<16x256xf32> to vector<16x256xbf16>
    %c0_i32 = arith.constant 0 : i32
    %7 = arith.cmpi eq, %arg1, %c0_i32 : i32
    %8 = arith.extui %7 : i1 to i32
    %c0_i32_5 = arith.constant 0 : i32
    %9 = arith.cmpi ne, %8, %c0_i32_5 : i32
    scf.if %9 {
      %cst_12 = arith.constant 0.000000e+00 : f32
      %15 = vector.broadcast %cst_12 : f32 to vector<16x256xf32>
      %c0_13 = arith.constant 0 : index
      %c0_14 = arith.constant 0 : index
      %16 = vector.load %arg6[%c0_13, %c0_14] : memref<16x256xf32, #tpu.memory_space<vmem>>, vector<16x256xf32>
      tpu.vector_store %arg6[%c0_13, %c0_14], %15 {strides = array<i32>} : memref<16x256xf32, #tpu.memory_space<vmem>>, vector<16x256xf32>,
    } else {
    }
    %c0_6 = arith.constant 0 : index
    %c0_7 = arith.constant 0 : index
    %10 = vector.load %arg6[%c0_6, %c0_7] : memref<16x256xf32, #tpu.memory_space<vmem>>, vector<16x256xf32>
    %c0_8 = arith.constant 0 : index
    %c0_9 = arith.constant 0 : index
    %11 = vector.load %arg4[%c0_8, %c0_9] : memref<256x256xbf16, #tpu.memory_space<vmem>>, vector<256x256xbf16>
    %cst = arith.constant dense<0.000000e+00> : vector<16x256xf32>
    %12 = tpu.matmul %6, %11, %cst {dimension_numbers = #tpu.dot_dimension_numbers<[1], [0], [0], [1], [0, 0, 1, 1], [], []>} : vector<16x256xbf16>, vector<256x256xbf16>, vector<16x256xf32> -> vector<16x256xf32>
    %13 = arith.addf %10, %12 : vector<16x256xf32>
    %c0_10 = arith.constant 0 : index
    %c0_11 = arith.constant 0 : index
    %14 = vector.load %arg6[%c0_10, %c0_11] : memref<16x256xf32, #tpu.memory_space<vmem>>, vector<16x256xf32>
    tpu.vector_store %arg6[%c0_10, %c0_11], %13 {strides = array<i32>} : memref<16x256xf32, #tpu.memory_space<vmem>>, vector<16x256xf32>,
    return
  }
  func.func @transform_0(%arg0: i32, %arg1: i32) -> (i32, i32) {
    %c0_i32 = arith.constant 0 : i32
    return %arg0, %arg1 : i32, i32
  }
  func.func @transform_1(%arg0: i32, %arg1: i32) -> (i32, i32) {
    %c0_i32 = arith.constant 0 : i32
    %c0_i32_0 = arith.constant 0 : i32
    return %c0_i32, %arg1 : i32, i32
  }
  func.func @transform_2(%arg0: i32, %arg1: i32) -> (i32, i32) {
    %c0_i32 = arith.constant 0 : i32
    %c0_i32_0 = arith.constant 0 : i32
    return %arg1, %c0_i32 : i32, i32
  }
  func.func @transform_3(%arg0: i32, %arg1: i32) -> (i32, i32) {
    %c0_i32 = arith.constant 0 : i32
    return %arg0, %arg1 : i32, i32
  }
  func.func @transform_4(%arg0: i32, %arg1: i32) -> (i32, i32) {
    %c0_i32 = arith.constant 0 : i32
    %c0_i32_0 = arith.constant 0 : i32
    return %arg0, %c0_i32 : i32, i32
  }
}

</mosaic_0001>

<llo_original>
// kernel: tpu_custom_call.1
$region0: #{tpu_custom_call.1}
  #allocation0 [shape = 'u32[]', space=smem, size = 0x4, offset = 0x4, fixed_abs, tag = 'smem constant byte address 0x4 - core index']
  #allocation1 [shape = 'u32[144,128]{1,0:T(1,128)}', space=vmem, size = 0x12000, scoped, tag = 'internal scratch']
  %s0 = inlined_call_operand.hbm [shape: f32[16,256], index: 0, kind: input, shape index: {}]
  %s1 = inlined_call_operand.hbm [shape: f32[1,256], index: 1, kind: input, shape index: {}]
  %s2 = inlined_call_operand.hbm [shape: bf16[256,256], index: 2, kind: input, shape index: {}]
  %s3 = inlined_call_operand.hbm [shape: f32[16,256], index: 3, kind: output, shape index: {0}]
  %s4 = inlined_call_operand.hbm [shape: f32[16,256], index: 4, kind: output, shape index: {1}]
  %5 = xla_tuple %s3, %s4
  %s6 = sld [smem:[#allocation0]]
  $region46: #{tpu_custom_call.1} parent=0
    _
  %s8 = ssub.s32 1, %s6
  %s9 = scalar_select 0, %s8, %s6
  $region1: #{tpu_custom_call.1} parent=0
    #allocation2 [shape = 'u8[16384]{0}', space=vmem, size = 0x4000, scoped, tag = 'input window, operand 0, single buffered']
    #allocation3 [shape = 's32[1]{0}', space=sflag, size = 0x4, scoped, tag = 'scoped memory for tpu_custom_call.1']
    #allocation4 [shape = 's32[1]{0}', space=sflag, size = 0x4, scoped, tag = 'scoped memory for tpu_custom_call.1']
    #allocation5 [shape = 'u8[1024]{0}', space=vmem, size = 0x400, scoped, tag = 'input window, operand 1, single buffered']
    #allocation6 [shape = 's32[1]{0}', space=sflag, size = 0x4, scoped, tag = 'scoped memory for tpu_custom_call.1']
    #allocation7 [shape = 'u8[131072]{0}', space=vmem, size = 0x20000, scoped, tag = 'input window, operand 2, single buffered']
    #allocation8 [shape = 'u8[16384]{0}', space=vmem, size = 0x4000, scoped, tag = 'output window, operand 0, single buffered']
    #allocation9 [shape = 'u8[16384]{0}', space=vmem, size = 0x4000, scoped, tag = 'output window, operand 1, single buffered']
    #allocation10 [shape = 's32[1]{0}', space=sflag, size = 0x4, scoped, tag = 'scoped memory for tpu_custom_call.1']
    %10 = vsyncpa [#allocation3], 0
    %11 = vsyncpa [#allocation6], 0
    %12 = vsyncpa [#allocation4], 0
    %13 = vsyncpa [#allocation10], 0
    // Predicated region
    $region2: #{tpu_custom_call.1} parent=1 // pred_check
      _
    $region3: #{tpu_custom_call.1} parent=1 // pred_check_branch
      %15 = sbr.rel (0) target = $region5
    $region4: #{tpu_custom_call.1} parent=1 // pred_region
      %s17 = ssub.s32 512, 512
      %18 = vsyncadd [#allocation3], %s17
      %s19 = sshll.u32 [#allocation2], 4
      %s20 = int_to_ptr.vmem [resolvable:$true] %s19
      %25 = dma.hbm_to_vmem [thread:$0]  %s0, 512, %s20, [#allocation3], 256, 256, 16
    $region5: #{tpu_custom_call.1} parent=1 // pred_fallthru
      _
    // Predicated region
    $region6: #{tpu_custom_call.1} parent=1 // pred_check
      _
    $region7: #{tpu_custom_call.1} parent=1 // pred_check_branch
      %27 = sbr.rel (0) target = $region9
    $region8: #{tpu_custom_call.1} parent=1 // pred_region
      %s29 = ssub.s32 32, 32
      %30 = vsyncadd [#allocation6], %s29
      %s32 = sshll.u32 [#allocation5], 4
      %s33 = int_to_ptr.vmem [resolvable:$true] %s32
      %35 = dma.hbm_to_vmem [thread:$0]  %s1, 32, %s33, [#allocation6]
    $region9: #{tpu_custom_call.1} parent=1 // pred_fallthru
      _
    // Predicated region
    $region10: #{tpu_custom_call.1} parent=1 // pred_check
      _
    $region11: #{tpu_custom_call.1} parent=1 // pred_check_branch
      %37 = sbr.rel (0) target = $region13
    $region12: #{tpu_custom_call.1} parent=1 // pred_region
      %s39 = ssub.s32 4096, 4096
      %40 = vsyncadd [#allocation6], %s39
      %s41 = sshll.u32 [#allocation7], 4
      %s42 = int_to_ptr.vmem [resolvable:$true] %s41
      %47 = dma.hbm_to_vmem [thread:$0]  %s2, 4096, %s42, [#allocation6], 128, 128, 8
    $region13: #{tpu_custom_call.1} parent=1 // pred_fallthru
      _
    // Predicated region
    $region14: #{tpu_custom_call.1} parent=1 // pred_check
      _
    $region15: #{tpu_custom_call.1} parent=1 // pred_check_branch
      %49 = sbr.rel (0) target = $region17
    $region16: #{tpu_custom_call.1} parent=1 // pred_region
      %50 = dma.done [#allocation3], 512
    $region17: #{tpu_custom_call.1} parent=1 // pred_fallthru
      _
    // Predicated region
    $region18: #{tpu_custom_call.1} parent=1 // pred_check
      _
    $region19: #{tpu_custom_call.1} parent=1 // pred_check_branch
      %52 = sbr.rel (0) target = $region21
    $region20: #{tpu_custom_call.1} parent=1 // pred_region
      %53 = dma.done [#allocation6], 32
    $region21: #{tpu_custom_call.1} parent=1 // pred_fallthru
      _
    // Predicated region
    $region22: #{tpu_custom_call.1} parent=1 // pred_check
      _
    $region23: #{tpu_custom_call.1} parent=1 // pred_check_branch
      %55 = sbr.rel (0) target = $region25
    $region24: #{tpu_custom_call.1} parent=1 // pred_region
      %56 = dma.done [#allocation6], 4096
    $region25: #{tpu_custom_call.1} parent=1 // pred_fallthru
      _
    %v57 = vld [vmem:[#allocation2] sm:$0xff]
    %v58 = vld [vmem:[#allocation2 + $0x8] sm:$0xff]
    %v59 = vld [vmem:[#allocation2 + $0x10] sm:$0xff]
    %v60 = vld [vmem:[#allocation2 + $0x18] sm:$0xff]
    %v61 = vmul.f32 %v57, 1.442695
    %v62 = vpow.pop %v61
    %v63 = vmul.f32 %v58, 1.442695
    %v64 = vpow.pop %v63
    %v65 = vmul.f32 %v59, 1.442695
    %v66 = vpow.pop %v65
    %v67 = vmul.f32 %v60, 1.442695
    %v68 = vpow.pop %v67
    %69 = vst [vmem:[#allocation8] sm:$0xff] %v62
    %70 = vst [vmem:[#allocation8 + $0x8] sm:$0xff] %v64
    %71 = vst [vmem:[#allocation8 + $0x10] sm:$0xff] %v66
    %72 = vst [vmem:[#allocation8 + $0x18] sm:$0xff] %v68
    %v73 = vld [vmem:[#allocation5] sm:$0x3]
    %v75 = vlaneseq
    %v76 = vshrl.u32 %v75, 7
    %v77 = vsub.s32 0, %v76
    %v78 = vrot.slane %v73, %v77
    %v79 = vlaneseq
    %v80 = vshrl.u32 %v79, 7
    %v81 = vsub.s32 1, %v80
    %v82 = vrot.slane %v73, %v81
    %v85 = vmul.f32 %v62, %v78
    %v86 = vmul.f32 %v64, %v82
    %v87 = vmul.f32 %v66, %v78
    %v88 = vmul.f32 %v68, %v82
    %v89 = vpack.c.bf16 %v87, %v85
    %v90 = vpack.c.bf16 %v88, %v86
    %p91 = scmp.eq.s32.totalorder 0, 0
    // Predicated region
    $region26: #{tpu_custom_call.1} parent=1 // pred_check
      %p92 = pneg %p91
    $region27: #{tpu_custom_call.1} parent=1 // pred_check_branch
      %94 = sbr.rel (%p92) target = $region29
    $region28: #{tpu_custom_call.1} parent=1 // pred_region
      %95 = vst [vmem:[#allocation9] sm:$0xff] 0.0
      %96 = vst [vmem:[#allocation9 + $0x8] sm:$0xff] 0.0
      %97 = vst [vmem:[#allocation9 + $0x10] sm:$0xff] 0.0
      %98 = vst [vmem:[#allocation9 + $0x18] sm:$0xff] 0.0
    $region29: #{tpu_custom_call.1} parent=1 // pred_fallthru
      _
    %v99 = vld [vmem:[#allocation9] sm:$0xff]
    %v100 = vld [vmem:[#allocation9 + $0x8] sm:$0xff]
    %v101 = vld [vmem:[#allocation9 + $0x10] sm:$0xff]
    %v102 = vld [vmem:[#allocation9 + $0x18] sm:$0xff]
    %v103 = vld [vmem:[#allocation7] sm:$0xff]
    %v104 = vld [vmem:[#allocation7 + $0x8] sm:$0xff]
    %v105 = vld [vmem:[#allocation7 + $0x10] sm:$0xff]
    %v106 = vld [vmem:[#allocation7 + $0x18] sm:$0xff]
    %v107 = vld [vmem:[#allocation7 + $0x20] sm:$0xff]
    %v108 = vld [vmem:[#allocation7 + $0x28] sm:$0xff]
    %v109 = vld [vmem:[#allocation7 + $0x30] sm:$0xff]
    %v110 = vld [vmem:[#allocation7 + $0x38] sm:$0xff]
    %v111 = vld [vmem:[#allocation7 + $0x40] sm:$0xff]
    %v112 = vld [vmem:[#allocation7 + $0x48] sm:$0xff]
    %v113 = vld [vmem:[#allocation7 + $0x50] sm:$0xff]
    %v114 = vld [vmem:[#allocation7 + $0x58] sm:$0xff]
    %v115 = vld [vmem:[#allocation7 + $0x60] sm:$0xff]
    %v116 = vld [vmem:[#allocation7 + $0x68] sm:$0xff]
    %v117 = vld [vmem:[#allocation7 + $0x70] sm:$0xff]
    %v118 = vld [vmem:[#allocation7 + $0x78] sm:$0xff]
    %v119 = vld [vmem:[#allocation7 + $0x80] sm:$0xff]
    %v120 = vld [vmem:[#allocation7 + $0x88] sm:$0xff]
    %v121 = vld [vmem:[#allocation7 + $0x90] sm:$0xff]
    %v122 = vld [vmem:[#allocation7 + $0x98] sm:$0xff]
    %v123 = vld [vmem:[#allocation7 + $0xa0] sm:$0xff]
    %v124 = vld [vmem:[#allocation7 + $0xa8] sm:$0xff]
    %v125 = vld [vmem:[#allocation7 + $0xb0] sm:$0xff]
    %v126 = vld [vmem:[#allocation7 + $0xb8] sm:$0xff]
    %v127 = vld [vmem:[#allocation7 + $0xc0] sm:$0xff]
    %v128 = vld [vmem:[#allocation7 + $0xc8] sm:$0xff]
    %v129 = vld [vmem:[#allocation7 + $0xd0] sm:$0xff]
    %v130 = vld [vmem:[#allocation7 + $0xd8] sm:$0xff]
    %v131 = vld [vmem:[#allocation7 + $0xe0] sm:$0xff]
    %v132 = vld [vmem:[#allocation7 + $0xe8] sm:$0xff]
    %v133 = vld [vmem:[#allocation7 + $0xf0] sm:$0xff]
    %v134 = vld [vmem:[#allocation7 + $0xf8] sm:$0xff]
    %v167 = vunpack.c.l.b16 %v103
    %v168 = vunpack.c.h.b16 %v103
    %v169 = vunpack.c.l.b16 %v104
    %v170 = vunpack.c.h.b16 %v104
    %v171 = vunpack.c.l.b16 %v105
    %v172 = vunpack.c.h.b16 %v105
    %v173 = vunpack.c.l.b16 %v106
    %v174 = vunpack.c.h.b16 %v106
    %v175 = vunpack.c.l.b16 %v107
    %v176 = vunpack.c.h.b16 %v107
    %v177 = vunpack.c.l.b16 %v108
    %v178 = vunpack.c.h.b16 %v108
    %v179 = vunpack.c.l.b16 %v109
    %v180 = vunpack.c.h.b16 %v109
    %v181 = vunpack.c.l.b16 %v110
    %v182 = vunpack.c.h.b16 %v110
    %v183 = vunpack.c.l.b16 %v111
    %v184 = vunpack.c.h.b16 %v111
    %v185 = vunpack.c.l.b16 %v112
    %v186 = vunpack.c.h.b16 %v112
    %v187 = vunpack.c.l.b16 %v113
    %v188 = vunpack.c.h.b16 %v113
    %v189 = vunpack.c.l.b16 %v114
    %v190 = vunpack.c.h.b16 %v114
    %v191 = vunpack.c.l.b16 %v115
    %v192 = vunpack.c.h.b16 %v115
    %v193 = vunpack.c.l.b16 %v116
    %v194 = vunpack.c.h.b16 %v116
    %v195 = vunpack.c.l.b16 %v117
    %v196 = vunpack.c.h.b16 %v117
    %v197 = vunpack.c.l.b16 %v118
    %v198 = vunpack.c.h.b16 %v118
    %v199 = vunpack.c.l.b16 %v119
    %v200 = vunpack.c.h.b16 %v119
    %v201 = vunpack.c.l.b16 %v120
    %v202 = vunpack.c.h.b16 %v120
    %v203 = vunpack.c.l.b16 %v121
    %v204 = vunpack.c.h.b16 %v121
    %v205 = vunpack.c.l.b16 %v122
    %v206 = vunpack.c.h.b16 %v122
    %v207 = vunpack.c.l.b16 %v123
    %v208 = vunpack.c.h.b16 %v123
    %v209 = vunpack.c.l.b16 %v124
    %v210 = vunpack.c.h.b16 %v124
    %v211 = vunpack.c.l.b16 %v125
    %v212 = vunpack.c.h.b16 %v125
    %v213 = vunpack.c.l.b16 %v126
    %v214 = vunpack.c.h.b16 %v126
    %v215 = vunpack.c.l.b16 %v127
    %v216 = vunpack.c.h.b16 %v127
    %v217 = vunpack.c.l.b16 %v128
    %v218 = vunpack.c.h.b16 %v128
    %v219 = vunpack.c.l.b16 %v129
    %v220 = vunpack.c.h.b16 %v129
    %v221 = vunpack.c.l.b16 %v130
    %v222 = vunpack.c.h.b16 %v130
    %v223 = vunpack.c.l.b16 %v131
    %v224 = vunpack.c.h.b16 %v131
    %v225 = vunpack.c.l.b16 %v132
    %v226 = vunpack.c.h.b16 %v132
    %v227 = vunpack.c.l.b16 %v133
    %v228 = vunpack.c.h.b16 %v133
    %v229 = vunpack.c.l.b16 %v134
    %v230 = vunpack.c.h.b16 %v134
    %v231 = vpack.c.b16 %v169, %v167
    %v232 = vpack.c.b16 %v170, %v168
    %v233 = vpack.c.b16 %v173, %v171
    %v234 = vpack.c.b16 %v174, %v172
    %v235 = vpack.c.b16 %v177, %v175
    %v236 = vpack.c.b16 %v178, %v176
    %v237 = vpack.c.b16 %v181, %v179
    %v238 = vpack.c.b16 %v182, %v180
    %v239 = vpack.c.b16 %v185, %v183
    %v240 = vpack.c.b16 %v186, %v184
    %v241 = vpack.c.b16 %v189, %v187
    %v242 = vpack.c.b16 %v190, %v188
    %v243 = vpack.c.b16 %v193, %v191
    %v244 = vpack.c.b16 %v194, %v192
    %v245 = vpack.c.b16 %v197, %v195
    %v246 = vpack.c.b16 %v198, %v196
    %v247 = vpack.c.b16 %v201, %v199
    %v248 = vpack.c.b16 %v202, %v200
    %v249 = vpack.c.b16 %v205, %v203
    %v250 = vpack.c.b16 %v206, %v204
    %v251 = vpack.c.b16 %v209, %v207
    %v252 = vpack.c.b16 %v210, %v208
    %v253 = vpack.c.b16 %v213, %v211
    %v254 = vpack.c.b16 %v214, %v212
    %v255 = vpack.c.b16 %v217, %v215
    %v256 = vpack.c.b16 %v218, %v216
    %v257 = vpack.c.b16 %v221, %v219
    %v258 = vpack.c.b16 %v222, %v220
    %v259 = vpack.c.b16 %v225, %v223
    %v260 = vpack.c.b16 %v226, %v224
    %v261 = vpack.c.b16 %v229, %v227
    %v262 = vpack.c.b16 %v230, %v228
    %295 = vmatprep.subr.bf16.mxu0 %v246
    %296 = vmatpush1.bf16.msra.mxu0 %v245
    %297 = vmatprep.subr.bf16.mxu0 %v244
    %298 = vmatpush1.bf16.msra.mxu0 %v243
    %299 = vmatprep.subr.bf16.mxu0 %v242
    %300 = vmatpush1.bf16.msra.mxu0 %v241
    %301 = vmatprep.subr.bf16.mxu0 %v240
    %302 = vmatpush1.bf16.msra.mxu0 %v239
    %303 = vmatprep.subr.bf16.mxu0 %v238
    %304 = vmatpush1.bf16.msra.mxu0 %v237
    %305 = vmatprep.subr.bf16.mxu0 %v236
    %306 = vmatpush1.bf16.msra.mxu0 %v235
    %307 = vmatprep.subr.bf16.mxu0 %v234
    %308 = vmatpush1.bf16.msra.mxu0 %v233
    %309 = vmatprep.subr.bf16.mxu0 %v232
    %310 = vmatpush1.bf16.msra.mxu0 %v231
    %311 = vmatprep.subr.bf16.mxu0 %v262
    %312 = vmatpush2.bf16.msra.mxu0 %v261
    %313 = vmatprep.subr.bf16.mxu0 %v260
    %314 = vmatpush2.bf16.msra.mxu0 %v259
    %315 = vmatprep.subr.bf16.mxu0 %v258
    %316 = vmatpush2.bf16.msra.mxu0 %v257
    %317 = vmatprep.subr.bf16.mxu0 %v256
    %318 = vmatpush2.bf16.msra.mxu0 %v255
    %319 = vmatprep.subr.bf16.mxu0 %v254
    %320 = vmatpush2.bf16.msra.mxu0 %v253
    %321 = vmatprep.subr.bf16.mxu0 %v252
    %322 = vmatpush2.bf16.msra.mxu0 %v251
    %323 = vmatprep.subr.bf16.mxu0 %v250
    %324 = vmatpush2.bf16.msra.mxu0 %v249
    %325 = vmatprep.subr.bf16.mxu0 %v248
    %326 = vmatpush2.bf16.msra.mxu0 %v247
    %327 = vmatprep.mubr.bf16.mxu0 %v90
    %328 = vmatmul.mubr.bf16.gmra.mxu0 %v89
    %v329 = vpop.f32.mrf.mxu0
    %v330 = vadd.f32 0.0, %v329
    %v331 = vpop.f32.mrf.mxu0
    %v332 = vadd.f32 0.0, %v331
    %v333 = vpop.f32.mrf.mxu0
    %v334 = vadd.f32 0.0, %v333
    %v335 = vpop.f32.mrf.mxu0
    %v336 = vadd.f32 0.0, %v335
    %337 = vdwg.mxu0
    %v338 = vadd.f32 %v99, %v330
    %v339 = vadd.f32 %v100, %v332
    %v340 = vadd.f32 %v101, %v334
    %v341 = vadd.f32 %v102, %v336
    %342 = vst [vmem:[#allocation9] sm:$0xff] %v338
    %343 = vst [vmem:[#allocation9 + $0x8] sm:$0xff] %v339
    %344 = vst [vmem:[#allocation9 + $0x10] sm:$0xff] %v340
    %345 = vst [vmem:[#allocation9 + $0x18] sm:$0xff] %v341
    // Predicated region
    $region30: #{tpu_custom_call.1} parent=1 // pred_check
      _
    $region31: #{tpu_custom_call.1} parent=1 // pred_check_branch
      %347 = sbr.rel (0) target = $region33
    $region32: #{tpu_custom_call.1} parent=1 // pred_region
      %s349 = ssub.s32 512, 512
      %350 = vsyncadd [#allocation4], %s349
      %s351 = sshll.u32 [#allocation8], 4
      %s352 = int_to_ptr.vmem [resolvable:$true] %s351
      %357 = dma.vmem_to_hbm [thread:$0]  %s352, 512, %s3, [#allocation4], 256, 256, 16
    $region33: #{tpu_custom_call.1} parent=1 // pred_fallthru
      _
    // Predicated region
    $region34: #{tpu_custom_call.1} parent=1 // pred_check
      _
    $region35: #{tpu_custom_call.1} parent=1 // pred_check_branch
      %359 = sbr.rel (0) target = $region37
    $region36: #{tpu_custom_call.1} parent=1 // pred_region
      %s361 = ssub.s32 512, 512
      %362 = vsyncadd [#allocation10], %s361
      %s363 = sshll.u32 [#allocation9], 4
      %s364 = int_to_ptr.vmem [resolvable:$true] %s363
      %369 = dma.vmem_to_hbm [thread:$0]  %s364, 512, %s4, [#allocation10], 256, 256, 16
    $region37: #{tpu_custom_call.1} parent=1 // pred_fallthru
      _
    // Predicated region
    $region38: #{tpu_custom_call.1} parent=1 // pred_check
      _
    $region39: #{tpu_custom_call.1} parent=1 // pred_check_branch
      %371 = sbr.rel (0) target = $region41
    $region40: #{tpu_custom_call.1} parent=1 // pred_region
      %372 = dma.done [#allocation4], 512
    $region41: #{tpu_custom_call.1} parent=1 // pred_fallthru
      _
    // Predicated region
    $region42: #{tpu_custom_call.1} parent=1 // pred_check
      _
    $region43: #{tpu_custom_call.1} parent=1 // pred_check_branch
      %374 = sbr.rel (0) target = $region45
    $region44: #{tpu_custom_call.1} parent=1 // pred_region
      %375 = dma.done [#allocation10], 512
    $region45: #{tpu_custom_call.1} parent=1 // pred_fallthru
      _
    %376 = vsyncpa [#allocation3], 1
    %377 = vsyncpa [#allocation6], 1
    %378 = vsyncpa [#allocation4], 1
    %379 = vsyncpa [#allocation10], 1

</llo_original>
